<compile_context>
chip_gen: v6e
topology: v6e:2x2x1
jax: 0.10.0
libtpu: 0.0.40
codegen_flags: <defaults>
</compile_context>

<pallas_src>
import jax
import jax.numpy as jnp
from jax import lax
from jax.experimental import pallas as pl
from jax.experimental.pallas import tpu as pltpu

# ---------------- configuration (small shapes implied by the module) ----------------
B = 2          # batch_size
T = 8          # num_steps (sequence length)
H = 32         # num_hiddens (rnn.hidden_size)
V = 128        # vocab_size (lane-dense output width)


# --------------------------------- Pallas kernel ------------------------------------
def rnn_model_kernel(tok_ref,                 # (T*B, 1) int32, time-major token ids
                     h0_ref,                  # (B, H)   initial hidden state
                     wxh_ref,                 # (V, H)   == torch weight_ih_l0.T
                     whh_ref,                 # (H, H)   == torch weight_hh_l0.T
                     bh_ref,                  # (1, H)   == b_ih + b_hh
                     wo_ref,                  # (H, V)   == torch linear.weight.T
                     bo_ref,                  # (1, V)   == torch linear.bias
                     out_ref,                 # (T*B, V) logits
                     state_ref,               # (B, H)   final hidden state
                     y_scratch):              # VMEM (T*B, H) collected hidden states
    # ---- one-hot encode every (t, b) token at once: (T*B, V) ----
    tok = tok_ref[...]                                        # (T*B, 1) int32
    vocab_ids = lax.broadcasted_iota(jnp.int32, (T * B, V), 1)
    x_onehot = (vocab_ids == tok).astype(jnp.float32)         # (T*B, V)

    # ---- batched input projection for all time steps (single MXU pass) ----
    xw = jnp.dot(x_onehot, wxh_ref[...],
                 preferred_element_type=jnp.float32) + bh_ref[0]   # (T*B, H)

    # ---- recurrence: h_t = tanh(x_t W_xh + b + h_{t-1} W_hh) ----
    whh = whh_ref[...]                                        # hoisted: loaded once
    h = h0_ref[...]                                           # (B, H)
    for t in range(T):                                        # static unroll (T small)
        h = jnp.tanh(xw[t * B:(t + 1) * B, :]
                     + jnp.dot(h, whh, preferred_element_type=jnp.float32))
        y_scratch[t * B:(t + 1) * B, :] = h
    state_ref[...] = h

    # ---- batched output projection (single MXU pass, lane-dense store) ----
    out_ref[...] = jnp.dot(y_scratch[...], wo_ref[...],
                           preferred_element_type=jnp.float32) + bo_ref[0]


# ----------------------------------- wrapper ----------------------------------------
@jax.jit
def rnn_model(inputs, state, params):
    """inputs: (B, T) int32 tokens; state: (1, B, H) float32; returns (output, state)."""
    wxh, whh, b_ih, b_hh, wo, bo = params
    tok_flat = inputs.T.reshape(T * B, 1).astype(jnp.int32)   # time-major, matches inputs.T
    h0 = state[0]                                             # (B, H)
    bh = (b_ih + b_hh).reshape(1, H)
    bo2 = bo.reshape(1, V)

    vmem = pl.BlockSpec(memory_space=pltpu.MemorySpace.VMEM)  # whole array, VMEM-resident once

    out, h_new = pl.pallas_call(
        rnn_model_kernel,
        out_shape=(jax.ShapeDtypeStruct((T * B, V), jnp.float32),
                   jax.ShapeDtypeStruct((B, H), jnp.float32)),
        in_specs=[vmem] * 7,
        out_specs=(vmem, vmem),
        scratch_shapes=[pltpu.VMEM((T * B, H), jnp.float32)],
    )(tok_flat, h0, wxh, whh, bh, wo, bo2)

    return out, h_new[None]                                   # state back to (1, B, H)


# --------------------------- pure-JAX reference (for checking) ----------------------
def rnn_model_ref(inputs, state, params):
    wxh, whh, b_ih, b_hh, wo, bo = params
    X = jax.nn.one_hot(inputs.T, V, dtype=jnp.float32)        # (T, B, V)

    def step(h, x):
        h_new = jnp.tanh(x @ wxh + b_ih + h @ whh + b_hh)
        return h_new, h_new

    h_last, Y = lax.scan(step, state[0], X)                   # Y: (T, B, H)
    out = Y.reshape(-1, H) @ wo + bo                          # (T*B, V)
    return out, h_last[None]


# -------------------------------------- main -----------------------------------------
if __name__ == "__main__":
    key = jax.random.PRNGKey(0)
    ks = jax.random.split(key, 8)

    # deterministic synthetic parameters (torch layout transposed to x @ W form)
    wxh = 0.1 * jax.random.normal(ks[0], (V, H), jnp.float32)   # weight_ih_l0.T
    whh = 0.1 * jax.random.normal(ks[1], (H, H), jnp.float32)   # weight_hh_l0.T
    b_ih = 0.1 * jax.random.normal(ks[2], (H,), jnp.float32)
    b_hh = 0.1 * jax.random.normal(ks[3], (H,), jnp.float32)
    wo = 0.1 * jax.random.normal(ks[4], (H, V), jnp.float32)    # linear.weight.T
    bo = 0.1 * jax.random.normal(ks[5], (V,), jnp.float32)      # linear.bias
    params = (wxh, whh, b_ih, b_hh, wo, bo)

    inputs = jax.random.randint(ks[6], (B, T), 0, V, dtype=jnp.int32)
    state0 = jnp.zeros((1, B, H), jnp.float32)                  # begin_state()

    out, state = rnn_model(inputs, state0, params)
    out = jax.block_until_ready(out)
    state = jax.block_until_ready(state)

    ref_out, ref_state = rnn_model_ref(inputs, state0, params)
    assert out.shape == (T * B, V)
    assert state.shape == (1, B, H)
    assert jnp.allclose(out, ref_out, atol=1e-4, rtol=1e-3), "output mismatch vs reference"
    assert jnp.allclose(state, ref_state, atol=1e-4, rtol=1e-3), "state mismatch vs reference"

    print("KERNEL_OK")
</pallas_src>

<mosaic_0001>
module attributes {stable_mosaic.version = 11 : i64} {
  func.func @rnn_model_kernel(%arg0: memref<16x1xi32, #tpu.memory_space<vmem>>, %arg1: memref<2x32xf32, #tpu.memory_space<vmem>>, %arg2: memref<128x32xf32, #tpu.memory_space<vmem>>, %arg3: memref<32x32xf32, #tpu.memory_space<vmem>>, %arg4: memref<1x32xf32, #tpu.memory_space<vmem>>, %arg5: memref<32x128xf32, #tpu.memory_space<vmem>>, %arg6: memref<1x128xf32, #tpu.memory_space<vmem>>, %arg7: memref<16x128xf32, #tpu.memory_space<vmem>>, %arg8: memref<2x32xf32, #tpu.memory_space<vmem>>, %arg9: memref<16x32xf32, #tpu.memory_space<vmem>>) attributes {dimension_semantics = [], scalar_prefetch = 0 : i64, scratch_operands = 1 : i64, tpu.core_type = #tpu.core_type<tc>} {
    %c0 = arith.constant 0 : index
    %c0_0 = arith.constant 0 : index
    %0 = vector.load %arg0[%c0, %c0_0] : memref<16x1xi32, #tpu.memory_space<vmem>>, vector<16x1xi32>
    %1 = tpu.iota {dimensions = array<i32: 1>} : vector<16x128xi32>
    %2 = vector.broadcast %0 : vector<16x1xi32> to vector<16x128xi32>
    %3 = arith.cmpi eq, %1, %2 : vector<16x128xi32>
    %4 = arith.extui %3 : vector<16x128xi1> to vector<16x128xi32>
    %5 = arith.sitofp %4 : vector<16x128xi32> to vector<16x128xf32>
    %c0_1 = arith.constant 0 : index
    %c0_2 = arith.constant 0 : index
    %6 = vector.load %arg2[%c0_1, %c0_2] : memref<128x32xf32, #tpu.memory_space<vmem>>, vector<128x32xf32>
    %cst = arith.constant dense<0.000000e+00> : vector<16x32xf32>
    %7 = tpu.matmul %5, %6, %cst {dimension_numbers = #tpu.dot_dimension_numbers<[1], [0], [0], [1], [0, 0, 1, 1], [], []>} : vector<16x128xf32>, vector<128x32xf32>, vector<16x32xf32> -> vector<16x32xf32>
    %c0_3 = arith.constant 0 : index
    %c0_4 = arith.constant 0 : index
    %8 = vector.load %arg4[%c0_3, %c0_4] : memref<1x32xf32, #tpu.memory_space<vmem>>, vector<1x32xf32>
    %9 = vector.shape_cast %8 : vector<1x32xf32> to vector<32xf32>
    %10 = vector.shape_cast %9 : vector<32xf32> to vector<1x32xf32>
    %11 = vector.broadcast %10 : vector<1x32xf32> to vector<16x32xf32>
    %12 = arith.addf %7, %11 : vector<16x32xf32>
    %c0_5 = arith.constant 0 : index
    %c0_6 = arith.constant 0 : index
    %13 = vector.load %arg3[%c0_5, %c0_6] : memref<32x32xf32, #tpu.memory_space<vmem>>, vector<32x32xf32>
    %c0_7 = arith.constant 0 : index
    %c0_8 = arith.constant 0 : index
    %14 = vector.load %arg1[%c0_7, %c0_8] : memref<2x32xf32, #tpu.memory_space<vmem>>, vector<2x32xf32>
    %15 = vector.extract_strided_slice %12 {offsets = [0, 0], sizes = [2, 32], strides = [1, 1]} : vector<16x32xf32> to vector<2x32xf32>
    %cst_9 = arith.constant dense<0.000000e+00> : vector<2x32xf32>
    %16 = tpu.matmul %14, %13, %cst_9 {dimension_numbers = #tpu.dot_dimension_numbers<[1], [0], [0], [1], [0, 0, 1, 1], [], []>} : vector<2x32xf32>, vector<32x32xf32>, vector<2x32xf32> -> vector<2x32xf32>
    %17 = arith.addf %15, %16 : vector<2x32xf32>
    %18 = math.tanh %17 : vector<2x32xf32>
    %c0_10 = arith.constant 0 : index
    %c0_11 = arith.constant 0 : index
    %19 = vector.load %arg9[%c0_10, %c0_11] : memref<16x32xf32, #tpu.memory_space<vmem>>, vector<2x32xf32>
    tpu.vector_store %arg9[%c0_10, %c0_11], %18 {strides = array<i32>} : memref<16x32xf32, #tpu.memory_space<vmem>>, vector<2x32xf32>,
    %20 = vector.extract_strided_slice %12 {offsets = [2, 0], sizes = [2, 32], strides = [1, 1]} : vector<16x32xf32> to vector<2x32xf32>
    %cst_12 = arith.constant dense<0.000000e+00> : vector<2x32xf32>
    %21 = tpu.matmul %18, %13, %cst_12 {dimension_numbers = #tpu.dot_dimension_numbers<[1], [0], [0], [1], [0, 0, 1, 1], [], []>} : vector<2x32xf32>, vector<32x32xf32>, vector<2x32xf32> -> vector<2x32xf32>
    %22 = arith.addf %20, %21 : vector<2x32xf32>
    %23 = math.tanh %22 : vector<2x32xf32>
    %c2 = arith.constant 2 : index
    %c0_13 = arith.constant 0 : index
    %24 = vector.load %arg9[%c2, %c0_13] : memref<16x32xf32, #tpu.memory_space<vmem>>, vector<2x32xf32>
    tpu.vector_store %arg9[%c2, %c0_13], %23 {strides = array<i32>} : memref<16x32xf32, #tpu.memory_space<vmem>>, vector<2x32xf32>,
    %25 = vector.extract_strided_slice %12 {offsets = [4, 0], sizes = [2, 32], strides = [1, 1]} : vector<16x32xf32> to vector<2x32xf32>
    %cst_14 = arith.constant dense<0.000000e+00> : vector<2x32xf32>
    %26 = tpu.matmul %23, %13, %cst_14 {dimension_numbers = #tpu.dot_dimension_numbers<[1], [0], [0], [1], [0, 0, 1, 1], [], []>} : vector<2x32xf32>, vector<32x32xf32>, vector<2x32xf32> -> vector<2x32xf32>
    %27 = arith.addf %25, %26 : vector<2x32xf32>
    %28 = math.tanh %27 : vector<2x32xf32>
    %c4 = arith.constant 4 : index
    %c0_15 = arith.constant 0 : index
    %29 = vector.load %arg9[%c4, %c0_15] : memref<16x32xf32, #tpu.memory_space<vmem>>, vector<2x32xf32>
    tpu.vector_store %arg9[%c4, %c0_15], %28 {strides = array<i32>} : memref<16x32xf32, #tpu.memory_space<vmem>>, vector<2x32xf32>,
    %30 = vector.extract_strided_slice %12 {offsets = [6, 0], sizes = [2, 32], strides = [1, 1]} : vector<16x32xf32> to vector<2x32xf32>
    %cst_16 = arith.constant dense<0.000000e+00> : vector<2x32xf32>
    %31 = tpu.matmul %28, %13, %cst_16 {dimension_numbers = #tpu.dot_dimension_numbers<[1], [0], [0], [1], [0, 0, 1, 1], [], []>} : vector<2x32xf32>, vector<32x32xf32>, vector<2x32xf32> -> vector<2x32xf32>
    %32 = arith.addf %30, %31 : vector<2x32xf32>
    %33 = math.tanh %32 : vector<2x32xf32>
    %c6 = arith.constant 6 : index
    %c0_17 = arith.constant 0 : index
    %34 = vector.load %arg9[%c6, %c0_17] : memref<16x32xf32, #tpu.memory_space<vmem>>, vector<2x32xf32>
    tpu.vector_store %arg9[%c6, %c0_17], %33 {strides = array<i32>} : memref<16x32xf32, #tpu.memory_space<vmem>>, vector<2x32xf32>,
    %35 = vector.extract_strided_slice %12 {offsets = [8, 0], sizes = [2, 32], strides = [1, 1]} : vector<16x32xf32> to vector<2x32xf32>
    %cst_18 = arith.constant dense<0.000000e+00> : vector<2x32xf32>
    %36 = tpu.matmul %33, %13, %cst_18 {dimension_numbers = #tpu.dot_dimension_numbers<[1], [0], [0], [1], [0, 0, 1, 1], [], []>} : vector<2x32xf32>, vector<32x32xf32>, vector<2x32xf32> -> vector<2x32xf32>
    %37 = arith.addf %35, %36 : vector<2x32xf32>
    %38 = math.tanh %37 : vector<2x32xf32>
    %c8 = arith.constant 8 : index
    %c0_19 = arith.constant 0 : index
    %39 = vector.load %arg9[%c8, %c0_19] : memref<16x32xf32, #tpu.memory_space<vmem>>, vector<2x32xf32>
    tpu.vector_store %arg9[%c8, %c0_19], %38 {strides = array<i32>} : memref<16x32xf32, #tpu.memory_space<vmem>>, vector<2x32xf32>,
    %40 = vector.extract_strided_slice %12 {offsets = [10, 0], sizes = [2, 32], strides = [1, 1]} : vector<16x32xf32> to vector<2x32xf32>
    %cst_20 = arith.constant dense<0.000000e+00> : vector<2x32xf32>
    %41 = tpu.matmul %38, %13, %cst_20 {dimension_numbers = #tpu.dot_dimension_numbers<[1], [0], [0], [1], [0, 0, 1, 1], [], []>} : vector<2x32xf32>, vector<32x32xf32>, vector<2x32xf32> -> vector<2x32xf32>
    %42 = arith.addf %40, %41 : vector<2x32xf32>
    %43 = math.tanh %42 : vector<2x32xf32>
    %c10 = arith.constant 10 : index
    %c0_21 = arith.constant 0 : index
    %44 = vector.load %arg9[%c10, %c0_21] : memref<16x32xf32, #tpu.memory_space<vmem>>, vector<2x32xf32>
    tpu.vector_store %arg9[%c10, %c0_21], %43 {strides = array<i32>} : memref<16x32xf32, #tpu.memory_space<vmem>>, vector<2x32xf32>,
    %45 = vector.extract_strided_slice %12 {offsets = [12, 0], sizes = [2, 32], strides = [1, 1]} : vector<16x32xf32> to vector<2x32xf32>
    %cst_22 = arith.constant dense<0.000000e+00> : vector<2x32xf32>
    %46 = tpu.matmul %43, %13, %cst_22 {dimension_numbers = #tpu.dot_dimension_numbers<[1], [0], [0], [1], [0, 0, 1, 1], [], []>} : vector<2x32xf32>, vector<32x32xf32>, vector<2x32xf32> -> vector<2x32xf32>
    %47 = arith.addf %45, %46 : vector<2x32xf32>
    %48 = math.tanh %47 : vector<2x32xf32>
    %c12 = arith.constant 12 : index
    %c0_23 = arith.constant 0 : index
    %49 = vector.load %arg9[%c12, %c0_23] : memref<16x32xf32, #tpu.memory_space<vmem>>, vector<2x32xf32>
    tpu.vector_store %arg9[%c12, %c0_23], %48 {strides = array<i32>} : memref<16x32xf32, #tpu.memory_space<vmem>>, vector<2x32xf32>,
    %50 = vector.extract_strided_slice %12 {offsets = [14, 0], sizes = [2, 32], strides = [1, 1]} : vector<16x32xf32> to vector<2x32xf32>
    %cst_24 = arith.constant dense<0.000000e+00> : vector<2x32xf32>
    %51 = tpu.matmul %48, %13, %cst_24 {dimension_numbers = #tpu.dot_dimension_numbers<[1], [0], [0], [1], [0, 0, 1, 1], [], []>} : vector<2x32xf32>, vector<32x32xf32>, vector<2x32xf32> -> vector<2x32xf32>
    %52 = arith.addf %50, %51 : vector<2x32xf32>
    %53 = math.tanh %52 : vector<2x32xf32>
    %c14 = arith.constant 14 : index
    %c0_25 = arith.constant 0 : index
    %54 = vector.load %arg9[%c14, %c0_25] : memref<16x32xf32, #tpu.memory_space<vmem>>, vector<2x32xf32>
    tpu.vector_store %arg9[%c14, %c0_25], %53 {strides = array<i32>} : memref<16x32xf32, #tpu.memory_space<vmem>>, vector<2x32xf32>,
    %c0_26 = arith.constant 0 : index
    %c0_27 = arith.constant 0 : index
    %55 = vector.load %arg8[%c0_26, %c0_27] : memref<2x32xf32, #tpu.memory_space<vmem>>, vector<2x32xf32>
    tpu.vector_store %arg8[%c0_26, %c0_27], %53 {strides = array<i32>} : memref<2x32xf32, #tpu.memory_space<vmem>>, vector<2x32xf32>,
    %c0_28 = arith.constant 0 : index
    %c0_29 = arith.constant 0 : index
    %56 = vector.load %arg9[%c0_28, %c0_29] : memref<16x32xf32, #tpu.memory_space<vmem>>, vector<16x32xf32>
    %c0_30 = arith.constant 0 : index
    %c0_31 = arith.constant 0 : index
    %57 = vector.load %arg5[%c0_30, %c0_31] : memref<32x128xf32, #tpu.memory_space<vmem>>, vector<32x128xf32>
    %cst_32 = arith.constant dense<0.000000e+00> : vector<16x128xf32>
    %58 = tpu.matmul %56, %57, %cst_32 {dimension_numbers = #tpu.dot_dimension_numbers<[1], [0], [0], [1], [0, 0, 1, 1], [], []>} : vector<16x32xf32>, vector<32x128xf32>, vector<16x128xf32> -> vector<16x128xf32>
    %c0_33 = arith.constant 0 : index
    %c0_34 = arith.constant 0 : index
    %59 = vector.load %arg6[%c0_33, %c0_34] : memref<1x128xf32, #tpu.memory_space<vmem>>, vector<1x128xf32>
    %60 = vector.shape_cast %59 : vector<1x128xf32> to vector<128xf32>
    %61 = vector.shape_cast %60 : vector<128xf32> to vector<1x128xf32>
    %62 = vector.broadcast %61 : vector<1x128xf32> to vector<16x128xf32>
    %63 = arith.addf %58, %62 : vector<16x128xf32>
    %c0_35 = arith.constant 0 : index
    %c0_36 = arith.constant 0 : index
    %64 = vector.load %arg7[%c0_35, %c0_36] : memref<16x128xf32, #tpu.memory_space<vmem>>, vector<16x128xf32>
    tpu.vector_store %arg7[%c0_35, %c0_36], %63 {strides = array<i32>} : memref<16x128xf32, #tpu.memory_space<vmem>>, vector<16x128xf32>,
    return
  }
}

</mosaic_0001>

<llo_original>
// kernel: rnn_model.1
$region0: #{rnn_model.1}
  #allocation0 [shape = 'u32[]', space=smem, size = 0x4, offset = 0x4, fixed_abs, tag = 'smem constant byte address 0x4 - core index']
  #allocation1 [shape = 'u32[144,128]{1,0:T(1,128)}', space=vmem, size = 0x12000, scoped, tag = 'internal scratch']
  #allocation2 [shape = 'f32[16,32]{1,0:T(8,128)}', space=vmem, size = 0x2000, scoped, tag = 'scratch operand']
  %s0 = inlined_call_operand.vmem [shape: s32[16,1], index: 0, kind: input, shape index: {}]
  %s1 = inlined_call_operand.vmem [shape: f32[2,32], index: 1, kind: input, shape index: {}]
  %s2 = inlined_call_operand.vmem [shape: f32[128,32], index: 2, kind: input, shape index: {}]
  %s3 = inlined_call_operand.vmem [shape: f32[32,32], index: 3, kind: input, shape index: {}]
  %s4 = inlined_call_operand.vmem [shape: f32[1,32], index: 4, kind: input, shape index: {}]
  %s5 = inlined_call_operand.vmem [shape: f32[32,128], index: 5, kind: input, shape index: {}]
  %s6 = inlined_call_operand.vmem [shape: f32[1,128], index: 6, kind: input, shape index: {}]
  %s7 = inlined_call_operand.hbm [shape: f32[16,128], index: 7, kind: output, shape index: {0}]
  %s8 = inlined_call_operand.hbm [shape: f32[2,32], index: 8, kind: output, shape index: {1}]
  %9 = xla_tuple %s7, %s8
  %s10 = sld [smem:[#allocation0]]
  $region46: #{rnn_model.1} parent=0
    _
  %s12 = ssub.s32 1, %s10
  %s13 = scalar_select 0, %s12, %s10
  $region1: #{rnn_model.1} parent=0
    #allocation3 [shape = 'u8[8192]{0}', space=vmem, size = 0x2000, scoped, tag = 'output window, operand 0, single buffered']
    #allocation4 [shape = 's32[1]{0}', space=sflag, size = 0x4, scoped, tag = 'scoped memory for rnn_model.1']
    #allocation5 [shape = 'u8[1024]{0}', space=vmem, size = 0x400, scoped, tag = 'output window, operand 1, single buffered']
    #allocation6 [shape = 's32[1]{0}', space=sflag, size = 0x4, scoped, tag = 'scoped memory for rnn_model.1']
    %14 = vsyncpa [#allocation4], 0
    %15 = vsyncpa [#allocation6], 0
    // Predicated region
    $region2: #{rnn_model.1} parent=1 // pred_check
      _
    $region3: #{rnn_model.1} parent=1 // pred_check_branch
      %17 = sbr.rel (0) target = $region5
    $region4: #{rnn_model.1} parent=1 // pred_region
      _
    $region5: #{rnn_model.1} parent=1 // pred_fallthru
      _
    // Predicated region
    $region6: #{rnn_model.1} parent=1 // pred_check
      _
    $region7: #{rnn_model.1} parent=1 // pred_check_branch
      %19 = sbr.rel (0) target = $region9
    $region8: #{rnn_model.1} parent=1 // pred_region
      _
    $region9: #{rnn_model.1} parent=1 // pred_fallthru
      _
    // Predicated region
    $region10: #{rnn_model.1} parent=1 // pred_check
      _
    $region11: #{rnn_model.1} parent=1 // pred_check_branch
      %21 = sbr.rel (0) target = $region13
    $region12: #{rnn_model.1} parent=1 // pred_region
      _
    $region13: #{rnn_model.1} parent=1 // pred_fallthru
      _
    // Predicated region
    $region14: #{rnn_model.1} parent=1 // pred_check
      _
    $region15: #{rnn_model.1} parent=1 // pred_check_branch
      %23 = sbr.rel (0) target = $region17
    $region16: #{rnn_model.1} parent=1 // pred_region
      _
    $region17: #{rnn_model.1} parent=1 // pred_fallthru
      _
    // Predicated region
    $region18: #{rnn_model.1} parent=1 // pred_check
      _
    $region19: #{rnn_model.1} parent=1 // pred_check_branch
      %25 = sbr.rel (0) target = $region21
    $region20: #{rnn_model.1} parent=1 // pred_region
      _
    $region21: #{rnn_model.1} parent=1 // pred_fallthru
      _
    // Predicated region
    $region22: #{rnn_model.1} parent=1 // pred_check
      _
    $region23: #{rnn_model.1} parent=1 // pred_check_branch
      %27 = sbr.rel (0) target = $region25
    $region24: #{rnn_model.1} parent=1 // pred_region
      _
    $region25: #{rnn_model.1} parent=1 // pred_fallthru
      _
    // Predicated region
    $region26: #{rnn_model.1} parent=1 // pred_check
      _
    $region27: #{rnn_model.1} parent=1 // pred_check_branch
      %29 = sbr.rel (0) target = $region29
    $region28: #{rnn_model.1} parent=1 // pred_region
      _
    $region29: #{rnn_model.1} parent=1 // pred_fallthru
      _
    %v30 = vld [vmem:[%s0] sm:$0xff]
    %v31 = vld [vmem:[%s0 + $0x8] sm:$0xff]
    %v32 = vlaneseq
    %v33 = vand.u32 %v32, 127
    %34 = vset.pattern.permute.xlu0 0
    %35 = vperm.xlu0 %34, %v30
    %v36 = vpop.permute.xlu0 %35
    %37 = vset.pattern.permute.xlu0 0
    %38 = vperm.xlu0 %37, %v31
    %v39 = vpop.permute.xlu0 %38
    %vm40 = vcmp.eq.s32.totalorder %v33, %v36
    %vm41 = vcmp.eq.s32.totalorder %v33, %v39
    %v42 = vsel %vm40, 1, 0
    %v43 = vsel %vm41, 1, 0
    %v44 = vcvt.s32.f32 %v42
    %v45 = vcvt.s32.f32 %v43
    %v46 = vld [vmem:[%s2] sm:$0xff]
    %v47 = vld [vmem:[%s2 + $0x8] sm:$0xff]
    %v48 = vld [vmem:[%s2 + $0x10] sm:$0xff]
    %v49 = vld [vmem:[%s2 + $0x18] sm:$0xff]
    %v50 = vld [vmem:[%s2 + $0x20] sm:$0xff]
    %v51 = vld [vmem:[%s2 + $0x28] sm:$0xff]
    %v52 = vld [vmem:[%s2 + $0x30] sm:$0xff]
    %v53 = vld [vmem:[%s2 + $0x38] sm:$0xff]
    %v54 = vld [vmem:[%s2 + $0x40] sm:$0xff]
    %v55 = vld [vmem:[%s2 + $0x48] sm:$0xff]
    %v56 = vld [vmem:[%s2 + $0x50] sm:$0xff]
    %v57 = vld [vmem:[%s2 + $0x58] sm:$0xff]
    %v58 = vld [vmem:[%s2 + $0x60] sm:$0xff]
    %v59 = vld [vmem:[%s2 + $0x68] sm:$0xff]
    %v60 = vld [vmem:[%s2 + $0x70] sm:$0xff]
    %v61 = vld [vmem:[%s2 + $0x78] sm:$0xff]
    %v62 = vld [vmem:[%s4] sm:$0x1]
    %v64 = vlaneseq
    %v65 = vshrl.u32 %v64, 7
    %v66 = vsub.s32 0, %v65
    %v67 = vrot.slane %v62, %v66
    %69 = vmatprep.subr.mxu0 0.0
    %70 = vmatpush1.msra.mxu0 %v61
    %71 = vmatprep.subr.mxu0 0.0
    %72 = vmatpush1.msra.mxu0 %v60
    %73 = vmatprep.subr.mxu0 0.0
    %74 = vmatpush1.msra.mxu0 %v59
    %75 = vmatprep.subr.mxu0 0.0
    %76 = vmatpush1.msra.mxu0 %v58
    %77 = vmatprep.subr.mxu0 0.0
    %78 = vmatpush1.msra.mxu0 %v57
    %79 = vmatprep.subr.mxu0 0.0
    %80 = vmatpush1.msra.mxu0 %v56
    %81 = vmatprep.subr.mxu0 0.0
    %82 = vmatpush1.msra.mxu0 %v55
    %83 = vmatprep.subr.mxu0 0.0
    %84 = vmatpush1.msra.mxu0 %v54
    %85 = vmatprep.subr.mxu0 0.0
    %86 = vmatpush1.msra.mxu0 %v53
    %87 = vmatprep.subr.mxu0 0.0
    %88 = vmatpush1.msra.mxu0 %v52
    %89 = vmatprep.subr.mxu0 0.0
    %90 = vmatpush1.msra.mxu0 %v51
    %91 = vmatprep.subr.mxu0 0.0
    %92 = vmatpush1.msra.mxu0 %v50
    %93 = vmatprep.subr.mxu0 0.0
    %94 = vmatpush1.msra.mxu0 %v49
    %95 = vmatprep.subr.mxu0 0.0
    %96 = vmatpush1.msra.mxu0 %v48
    %97 = vmatprep.subr.mxu0 0.0
    %98 = vmatpush1.msra.mxu0 %v47
    %99 = vmatprep.subr.mxu0 0.0
    %100 = vmatpush1.msra.mxu0 %v46
    %101 = vmatprep.subr.mxu0 0.0
    %102 = vmatpush2.msra.mxu0 0.0
    %103 = vmatprep.subr.mxu0 0.0
    %104 = vmatpush2.msra.mxu0 0.0
    %105 = vmatprep.subr.mxu0 0.0
    %106 = vmatpush2.msra.mxu0 0.0
    %107 = vmatprep.subr.mxu0 0.0
    %108 = vmatpush2.msra.mxu0 0.0
    %109 = vmatprep.subr.mxu0 0.0
    %110 = vmatpush2.msra.mxu0 0.0
    %111 = vmatprep.subr.mxu0 0.0
    %112 = vmatpush2.msra.mxu0 0.0
    %113 = vmatprep.subr.mxu0 0.0
    %114 = vmatpush2.msra.mxu0 0.0
    %115 = vmatprep.subr.mxu0 0.0
    %116 = vmatpush2.msra.mxu0 0.0
    %117 = vmatprep.subr.mxu0 0.0
    %118 = vmatpush2.msra.mxu0 0.0
    %119 = vmatprep.subr.mxu0 0.0
    %120 = vmatpush2.msra.mxu0 0.0
    %121 = vmatprep.subr.mxu0 0.0
    %122 = vmatpush2.msra.mxu0 0.0
    %123 = vmatprep.subr.mxu0 0.0
    %124 = vmatpush2.msra.mxu0 0.0
    %125 = vmatprep.subr.mxu0 0.0
    %126 = vmatpush2.msra.mxu0 0.0
    %127 = vmatprep.subr.mxu0 0.0
    %128 = vmatpush2.msra.mxu0 0.0
    %129 = vmatprep.subr.mxu0 0.0
    %130 = vmatpush2.msra.mxu0 0.0
    %131 = vmatprep.subr.mxu0 0.0
    %132 = vmatpush2.msra.mxu0 0.0
    %133 = vmatprep.mubr.f32.mxu0 0.0
    %134 = vmatmul.mubr.f32.gmra.mxu0 %v44
    %v135 = vpop.f32.mrf.mxu0
    %v136 = vadd.f32 %v67, %v135
    %v137 = vpop.f32.mrf.mxu0
    %138 = vmatprep.mubr.f32.mxu0 0.0
    %139 = vmatmul.mubr.f32.gmra.mxu0 %v45
    %v140 = vpop.f32.mrf.mxu0
    %v141 = vadd.f32 %v67, %v140
    %v142 = vpop.f32.mrf.mxu0
    %143 = vdwg.mxu0
    %v144 = vld [vmem:[%s3] sm:$0xff]
    %v145 = vld [vmem:[%s3 + $0x8] sm:$0xff]
    %v146 = vld [vmem:[%s3 + $0x10] sm:$0xff]
    %v147 = vld [vmem:[%s3 + $0x18] sm:$0xff]
    %v148 = vld [vmem:[%s1] sm:$0x3]
    %vm149 = vcmask 261120
    %v151 = vsel %vm149, %v148, 0
    %153 = vmatprep.subr.mxu0 0.0
    %154 = vmatpush1.msra.mxu0 0.0
    %155 = vmatprep.subr.mxu0 0.0
    %156 = vmatpush1.msra.mxu0 0.0
    %157 = vmatprep.subr.mxu0 0.0
    %158 = vmatpush1.msra.mxu0 0.0
    %159 = vmatprep.subr.mxu0 0.0
    %160 = vmatpush1.msra.mxu0 0.0
    %161 = vmatprep.subr.mxu0 0.0
    %162 = vmatpush1.msra.mxu0 0.0
    %163 = vmatprep.subr.mxu0 0.0
    %164 = vmatpush1.msra.mxu0 0.0
    %165 = vmatprep.subr.mxu0 0.0
    %166 = vmatpush1.msra.mxu0 0.0
    %167 = vmatprep.subr.mxu0 0.0
    %168 = vmatpush1.msra.mxu0 0.0
    %169 = vmatprep.subr.mxu0 0.0
    %170 = vmatpush1.msra.mxu0 0.0
    %171 = vmatprep.subr.mxu0 0.0
    %172 = vmatpush1.msra.mxu0 0.0
    %173 = vmatprep.subr.mxu0 0.0
    %174 = vmatpush1.msra.mxu0 0.0
    %175 = vmatprep.subr.mxu0 0.0
    %176 = vmatpush1.msra.mxu0 0.0
    %177 = vmatprep.subr.mxu0 0.0
    %178 = vmatpush1.msra.mxu0 %v147
    %179 = vmatprep.subr.mxu0 0.0
    %180 = vmatpush1.msra.mxu0 %v146
    %181 = vmatprep.subr.mxu0 0.0
    %182 = vmatpush1.msra.mxu0 %v145
    %183 = vmatprep.subr.mxu0 0.0
    %184 = vmatpush1.msra.mxu0 %v144
    %185 = vmatprep.subr.mxu0 0.0
    %186 = vmatpush2.msra.mxu0 0.0
    %187 = vmatprep.subr.mxu0 0.0
    %188 = vmatpush2.msra.mxu0 0.0
    %189 = vmatprep.subr.mxu0 0.0
    %190 = vmatpush2.msra.mxu0 0.0
    %191 = vmatprep.subr.mxu0 0.0
    %192 = vmatpush2.msra.mxu0 0.0
    %193 = vmatprep.subr.mxu0 0.0
    %194 = vmatpush2.msra.mxu0 0.0
    %195 = vmatprep.subr.mxu0 0.0
    %196 = vmatpush2.msra.mxu0 0.0
    %197 = vmatprep.subr.mxu0 0.0
    %198 = vmatpush2.msra.mxu0 0.0
    %199 = vmatprep.subr.mxu0 0.0
    %200 = vmatpush2.msra.mxu0 0.0
    %201 = vmatprep.subr.mxu0 0.0
    %202 = vmatpush2.msra.mxu0 0.0
    %203 = vmatprep.subr.mxu0 0.0
    %204 = vmatpush2.msra.mxu0 0.0
    %205 = vmatprep.subr.mxu0 0.0
    %206 = vmatpush2.msra.mxu0 0.0
    %207 = vmatprep.subr.mxu0 0.0
    %208 = vmatpush2.msra.mxu0 0.0
    %209 = vmatprep.subr.mxu0 0.0
    %210 = vmatpush2.msra.mxu0 0.0
    %211 = vmatprep.subr.mxu0 0.0
    %212 = vmatpush2.msra.mxu0 0.0
    %213 = vmatprep.subr.mxu0 0.0
    %214 = vmatpush2.msra.mxu0 0.0
    %215 = vmatprep.subr.mxu0 0.0
    %216 = vmatpush2.msra.mxu0 0.0
    %217 = vmatprep.mubr.f32.mxu0 0.0
    %218 = vmatmul.mubr.f32.gmra.mxu0 %v151
    %v219 = vpop.f32.mrf.mxu0
    %v220 = vadd.f32 0.0, %v219
    %v221 = vpop.f32.mrf.mxu0
    %222 = vdwg.mxu0
    %v223 = vadd.f32 %v136, %v220
    %v224 = vtanh.pop %v223
    %vm225 = vcmask 254976
    %226 = vst.msk [vmem:[#allocation2] sm:$0x3] %vm225, %v224
    %v228 = vsel %vm149, %v224, 0
    %230 = vmatprep.subr.mxu0 0.0
    %231 = vmatpush1.msra.mxu0 0.0
    %232 = vmatprep.subr.mxu0 0.0
    %233 = vmatpush1.msra.mxu0 0.0
    %234 = vmatprep.subr.mxu0 0.0
    %235 = vmatpush1.msra.mxu0 0.0
    %236 = vmatprep.subr.mxu0 0.0
    %237 = vmatpush1.msra.mxu0 0.0
    %238 = vmatprep.subr.mxu0 0.0
    %239 = vmatpush1.msra.mxu0 0.0
    %240 = vmatprep.subr.mxu0 0.0
    %241 = vmatpush1.msra.mxu0 0.0
    %242 = vmatprep.subr.mxu0 0.0
    %243 = vmatpush1.msra.mxu0 0.0
    %244 = vmatprep.subr.mxu0 0.0
    %245 = vmatpush1.msra.mxu0 0.0
    %246 = vmatprep.subr.mxu0 0.0
    %247 = vmatpush1.msra.mxu0 0.0
    %248 = vmatprep.subr.mxu0 0.0
    %249 = vmatpush1.msra.mxu0 0.0
    %250 = vmatprep.subr.mxu0 0.0
    %251 = vmatpush1.msra.mxu0 0.0
    %252 = vmatprep.subr.mxu0 0.0
    %253 = vmatpush1.msra.mxu0 0.0
    %254 = vmatprep.subr.mxu0 0.0
    %255 = vmatpush1.msra.mxu0 %v147
    %256 = vmatprep.subr.mxu0 0.0
    %257 = vmatpush1.msra.mxu0 %v146
    %258 = vmatprep.subr.mxu0 0.0
    %259 = vmatpush1.msra.mxu0 %v145
    %260 = vmatprep.subr.mxu0 0.0
    %261 = vmatpush1.msra.mxu0 %v144
    %262 = vmatprep.subr.mxu0 0.0
    %263 = vmatpush2.msra.mxu0 0.0
    %264 = vmatprep.subr.mxu0 0.0
    %265 = vmatpush2.msra.mxu0 0.0
    %266 = vmatprep.subr.mxu0 0.0
    %267 = vmatpush2.msra.mxu0 0.0
    %268 = vmatprep.subr.mxu0 0.0
    %269 = vmatpush2.msra.mxu0 0.0
    %270 = vmatprep.subr.mxu0 0.0
    %271 = vmatpush2.msra.mxu0 0.0
    %272 = vmatprep.subr.mxu0 0.0
    %273 = vmatpush2.msra.mxu0 0.0
    %274 = vmatprep.subr.mxu0 0.0
    %275 = vmatpush2.msra.mxu0 0.0
    %276 = vmatprep.subr.mxu0 0.0
    %277 = vmatpush2.msra.mxu0 0.0
    %278 = vmatprep.subr.mxu0 0.0
    %279 = vmatpush2.msra.mxu0 0.0
    %280 = vmatprep.subr.mxu0 0.0
    %281 = vmatpush2.msra.mxu0 0.0
    %282 = vmatprep.subr.mxu0 0.0
    %283 = vmatpush2.msra.mxu0 0.0
    %284 = vmatprep.subr.mxu0 0.0
    %285 = vmatpush2.msra.mxu0 0.0
    %286 = vmatprep.subr.mxu0 0.0
    %287 = vmatpush2.msra.mxu0 0.0
    %288 = vmatprep.subr.mxu0 0.0
    %289 = vmatpush2.msra.mxu0 0.0
    %290 = vmatprep.subr.mxu0 0.0
    %291 = vmatpush2.msra.mxu0 0.0
    %292 = vmatprep.subr.mxu0 0.0
    %293 = vmatpush2.msra.mxu0 0.0
    %294 = vmatprep.mubr.f32.mxu0 0.0
    %295 = vmatmul.mubr.f32.gmra.mxu0 %v228
    %v296 = vpop.f32.mrf.mxu0
    %v297 = vadd.f32 0.0, %v296
    %v298 = vpop.f32.mrf.mxu0
    %299 = vdwg.mxu0
    %v301 = vrot.slane %v297, 6
    %v303 = vadd.f32 %v136, %v301
    %v304 = vtanh.pop %v303
    %vm305 = vcmask 257026
    %306 = vst.msk [vmem:[#allocation2] sm:$0xc] %vm305, %v304
    %v308 = vrot.slane %v304, 2
    %v309 = vsel %vm149, %v308, 0
    %311 = vmatprep.subr.mxu0 0.0
    %312 = vmatpush1.msra.mxu0 0.0
    %313 = vmatprep.subr.mxu0 0.0
    %314 = vmatpush1.msra.mxu0 0.0
    %315 = vmatprep.subr.mxu0 0.0
    %316 = vmatpush1.msra.mxu0 0.0
    %317 = vmatprep.subr.mxu0 0.0
    %318 = vmatpush1.msra.mxu0 0.0
    %319 = vmatprep.subr.mxu0 0.0
    %320 = vmatpush1.msra.mxu0 0.0
    %321 = vmatprep.subr.mxu0 0.0
    %322 = vmatpush1.msra.mxu0 0.0
    %323 = vmatprep.subr.mxu0 0.0
    %324 = vmatpush1.msra.mxu0 0.0
    %325 = vmatprep.subr.mxu0 0.0
    %326 = vmatpush1.msra.mxu0 0.0
    %327 = vmatprep.subr.mxu0 0.0
    %328 = vmatpush1.msra.mxu0 0.0
    %329 = vmatprep.subr.mxu0 0.0
    %330 = vmatpush1.msra.mxu0 0.0
    %331 = vmatprep.subr.mxu0 0.0
    %332 = vmatpush1.msra.mxu0 0.0
    %333 = vmatprep.subr.mxu0 0.0
    %334 = vmatpush1.msra.mxu0 0.0
    %335 = vmatprep.subr.mxu0 0.0
    %336 = vmatpush1.msra.mxu0 %v147
    %337 = vmatprep.subr.mxu0 0.0
    %338 = vmatpush1.msra.mxu0 %v146
    %339 = vmatprep.subr.mxu0 0.0
    %340 = vmatpush1.msra.mxu0 %v145
    %341 = vmatprep.subr.mxu0 0.0
    %342 = vmatpush1.msra.mxu0 %v144
    %343 = vmatprep.subr.mxu0 0.0
    %344 = vmatpush2.msra.mxu0 0.0
    %345 = vmatprep.subr.mxu0 0.0
    %346 = vmatpush2.msra.mxu0 0.0
    %347 = vmatprep.subr.mxu0 0.0
    %348 = vmatpush2.msra.mxu0 0.0
    %349 = vmatprep.subr.mxu0 0.0
    %350 = vmatpush2.msra.mxu0 0.0
    %351 = vmatprep.subr.mxu0 0.0
    %352 = vmatpush2.msra.mxu0 0.0
    %353 = vmatprep.subr.mxu0 0.0
    %354 = vmatpush2.msra.mxu0 0.0
    %355 = vmatprep.subr.mxu0 0.0
    %356 = vmatpush2.msra.mxu0 0.0
    %357 = vmatprep.subr.mxu0 0.0
    %358 = vmatpush2.msra.mxu0 0.0
    %359 = vmatprep.subr.mxu0 0.0
    %360 = vmatpush2.msra.mxu0 0.0
    %361 = vmatprep.subr.mxu0 0.0
    %362 = vmatpush2.msra.mxu0 0.0
    %363 = vmatprep.subr.mxu0 0.0
    %364 = vmatpush2.msra.mxu0 0.0
    %365 = vmatprep.subr.mxu0 0.0
    %366 = vmatpush2.msra.mxu0 0.0
    %367 = vmatprep.subr.mxu0 0.0
    %368 = vmatpush2.msra.mxu0 0.0
    %369 = vmatprep.subr.mxu0 0.0
    %370 = vmatpush2.msra.mxu0 0.0
    %371 = vmatprep.subr.mxu0 0.0
    %372 = vmatpush2.msra.mxu0 0.0
    %373 = vmatprep.subr.mxu0 0.0
    %374 = vmatpush2.msra.mxu0 0.0
    %375 = vmatprep.mubr.f32.mxu0 0.0
    %376 = vmatmul.mubr.f32.gmra.mxu0 %v309
    %v377 = vpop.f32.mrf.mxu0
    %v378 = vadd.f32 0.0, %v377
    %v379 = vpop.f32.mrf.mxu0
    %380 = vdwg.mxu0
    %v382 = vrot.slane %v378, 4
    %v384 = vadd.f32 %v136, %v382
    %v385 = vtanh.pop %v384
    %vm386 = vcmask 259076
    %387 = vst.msk [vmem:[#allocation2] sm:$0x30] %vm386, %v385
    %v389 = vrot.slane %v385, 4
    %v390 = vsel %vm149, %v389, 0
    %392 = vmatprep.subr.mxu0 0.0
    %393 = vmatpush1.msra.mxu0 0.0
    %394 = vmatprep.subr.mxu0 0.0
    %395 = vmatpush1.msra.mxu0 0.0
    %396 = vmatprep.subr.mxu0 0.0
    %397 = vmatpush1.msra.mxu0 0.0
    %398 = vmatprep.subr.mxu0 0.0
    %399 = vmatpush1.msra.mxu0 0.0
    %400 = vmatprep.subr.mxu0 0.0
    %401 = vmatpush1.msra.mxu0 0.0
    %402 = vmatprep.subr.mxu0 0.0
    %403 = vmatpush1.msra.mxu0 0.0
    %404 = vmatprep.subr.mxu0 0.0
    %405 = vmatpush1.msra.mxu0 0.0
    %406 = vmatprep.subr.mxu0 0.0
    %407 = vmatpush1.msra.mxu0 0.0
    %408 = vmatprep.subr.mxu0 0.0
    %409 = vmatpush1.msra.mxu0 0.0
    %410 = vmatprep.subr.mxu0 0.0
    %411 = vmatpush1.msra.mxu0 0.0
    %412 = vmatprep.subr.mxu0 0.0
    %413 = vmatpush1.msra.mxu0 0.0
    %414 = vmatprep.subr.mxu0 0.0
    %415 = vmatpush1.msra.mxu0 0.0
    %416 = vmatprep.subr.mxu0 0.0
    %417 = vmatpush1.msra.mxu0 %v147
    %418 = vmatprep.subr.mxu0 0.0
    %419 = vmatpush1.msra.mxu0 %v146
    %420 = vmatprep.subr.mxu0 0.0
    %421 = vmatpush1.msra.mxu0 %v145
    %422 = vmatprep.subr.mxu0 0.0
    %423 = vmatpush1.msra.mxu0 %v144
    %424 = vmatprep.subr.mxu0 0.0
    %425 = vmatpush2.msra.mxu0 0.0
    %426 = vmatprep.subr.mxu0 0.0
    %427 = vmatpush2.msra.mxu0 0.0
    %428 = vmatprep.subr.mxu0 0.0
    %429 = vmatpush2.msra.mxu0 0.0
    %430 = vmatprep.subr.mxu0 0.0
    %431 = vmatpush2.msra.mxu0 0.0
    %432 = vmatprep.subr.mxu0 0.0
    %433 = vmatpush2.msra.mxu0 0.0
    %434 = vmatprep.subr.mxu0 0.0
    %435 = vmatpush2.msra.mxu0 0.0
    %436 = vmatprep.subr.mxu0 0.0
    %437 = vmatpush2.msra.mxu0 0.0
    %438 = vmatprep.subr.mxu0 0.0
    %439 = vmatpush2.msra.mxu0 0.0
    %440 = vmatprep.subr.mxu0 0.0
    %441 = vmatpush2.msra.mxu0 0.0
    %442 = vmatprep.subr.mxu0 0.0
    %443 = vmatpush2.msra.mxu0 0.0
    %444 = vmatprep.subr.mxu0 0.0
    %445 = vmatpush2.msra.mxu0 0.0
    %446 = vmatprep.subr.mxu0 0.0
    %447 = vmatpush2.msra.mxu0 0.0
    %448 = vmatprep.subr.mxu0 0.0
    %449 = vmatpush2.msra.mxu0 0.0
    %450 = vmatprep.subr.mxu0 0.0
    %451 = vmatpush2.msra.mxu0 0.0
    %452 = vmatprep.subr.mxu0 0.0
    %453 = vmatpush2.msra.mxu0 0.0
    %454 = vmatprep.subr.mxu0 0.0
    %455 = vmatpush2.msra.mxu0 0.0
    %456 = vmatprep.mubr.f32.mxu0 0.0
    %457 = vmatmul.mubr.f32.gmra.mxu0 %v390
    %v458 = vpop.f32.mrf.mxu0
    %v459 = vadd.f32 0.0, %v458
    %v460 = vpop.f32.mrf.mxu0
    %461 = vdwg.mxu0
    %v463 = vrot.slane %v459, 2
    %v465 = vadd.f32 %v136, %v463
    %v466 = vtanh.pop %v465
    %vm467 = vcmask 261126
    %468 = vst.msk [vmem:[#allocation2] sm:$0xc0] %vm467, %v466
    %v470 = vrot.slane %v466, 6
    %v471 = vsel %vm149, %v470, 0
    %473 = vmatprep.subr.mxu0 0.0
    %474 = vmatpush1.msra.mxu0 0.0
    %475 = vmatprep.subr.mxu0 0.0
    %476 = vmatpush1.msra.mxu0 0.0
    %477 = vmatprep.subr.mxu0 0.0
    %478 = vmatpush1.msra.mxu0 0.0
    %479 = vmatprep.subr.mxu0 0.0
    %480 = vmatpush1.msra.mxu0 0.0
    %481 = vmatprep.subr.mxu0 0.0
    %482 = vmatpush1.msra.mxu0 0.0
    %483 = vmatprep.subr.mxu0 0.0
    %484 = vmatpush1.msra.mxu0 0.0
    %485 = vmatprep.subr.mxu0 0.0
    %486 = vmatpush1.msra.mxu0 0.0
    %487 = vmatprep.subr.mxu0 0.0
    %488 = vmatpush1.msra.mxu0 0.0
    %489 = vmatprep.subr.mxu0 0.0
    %490 = vmatpush1.msra.mxu0 0.0
    %491 = vmatprep.subr.mxu0 0.0
    %492 = vmatpush1.msra.mxu0 0.0
    %493 = vmatprep.subr.mxu0 0.0
    %494 = vmatpush1.msra.mxu0 0.0
    %495 = vmatprep.subr.mxu0 0.0
    %496 = vmatpush1.msra.mxu0 0.0
    %497 = vmatprep.subr.mxu0 0.0
    %498 = vmatpush1.msra.mxu0 %v147
    %499 = vmatprep.subr.mxu0 0.0
    %500 = vmatpush1.msra.mxu0 %v146
    %501 = vmatprep.subr.mxu0 0.0
    %502 = vmatpush1.msra.mxu0 %v145
    %503 = vmatprep.subr.mxu0 0.0
    %504 = vmatpush1.msra.mxu0 %v144
    %505 = vmatprep.subr.mxu0 0.0
    %506 = vmatpush2.msra.mxu0 0.0
    %507 = vmatprep.subr.mxu0 0.0
    %508 = vmatpush2.msra.mxu0 0.0
    %509 = vmatprep.subr.mxu0 0.0
    %510 = vmatpush2.msra.mxu0 0.0
    %511 = vmatprep.subr.mxu0 0.0
    %512 = vmatpush2.msra.mxu0 0.0
    %513 = vmatprep.subr.mxu0 0.0
    %514 = vmatpush2.msra.mxu0 0.0
    %515 = vmatprep.subr.mxu0 0.0
    %516 = vmatpush2.msra.mxu0 0.0
    %517 = vmatprep.subr.mxu0 0.0
    %518 = vmatpush2.msra.mxu0 0.0
    %519 = vmatprep.subr.mxu0 0.0
    %520 = vmatpush2.msra.mxu0 0.0
    %521 = vmatprep.subr.mxu0 0.0
    %522 = vmatpush2.msra.mxu0 0.0
    %523 = vmatprep.subr.mxu0 0.0
    %524 = vmatpush2.msra.mxu0 0.0
    %525 = vmatprep.subr.mxu0 0.0
    %526 = vmatpush2.msra.mxu0 0.0
    %527 = vmatprep.subr.mxu0 0.0
    %528 = vmatpush2.msra.mxu0 0.0
    %529 = vmatprep.subr.mxu0 0.0
    %530 = vmatpush2.msra.mxu0 0.0
    %531 = vmatprep.subr.mxu0 0.0
    %532 = vmatpush2.msra.mxu0 0.0
    %533 = vmatprep.subr.mxu0 0.0
    %534 = vmatpush2.msra.mxu0 0.0
    %535 = vmatprep.subr.mxu0 0.0
    %536 = vmatpush2.msra.mxu0 0.0
    %537 = vmatprep.mubr.f32.mxu0 0.0
    %538 = vmatmul.mubr.f32.gmra.mxu0 %v471
    %v539 = vpop.f32.mrf.mxu0
    %v540 = vadd.f32 0.0, %v539
    %v541 = vpop.f32.mrf.mxu0
    %542 = vdwg.mxu0
    %v543 = vadd.f32 %v141, %v540
    %v544 = vtanh.pop %v543
    %545 = vst.msk [vmem:[#allocation2 + $0x8] sm:$0x3] %vm225, %v544
    %v547 = vsel %vm149, %v544, 0
    %549 = vmatprep.subr.mxu0 0.0
    %550 = vmatpush1.msra.mxu0 0.0
    %551 = vmatprep.subr.mxu0 0.0
    %552 = vmatpush1.msra.mxu0 0.0
    %553 = vmatprep.subr.mxu0 0.0
    %554 = vmatpush1.msra.mxu0 0.0
    %555 = vmatprep.subr.mxu0 0.0
    %556 = vmatpush1.msra.mxu0 0.0
    %557 = vmatprep.subr.mxu0 0.0
    %558 = vmatpush1.msra.mxu0 0.0
    %559 = vmatprep.subr.mxu0 0.0
    %560 = vmatpush1.msra.mxu0 0.0
    %561 = vmatprep.subr.mxu0 0.0
    %562 = vmatpush1.msra.mxu0 0.0
    %563 = vmatprep.subr.mxu0 0.0
    %564 = vmatpush1.msra.mxu0 0.0
    %565 = vmatprep.subr.mxu0 0.0
    %566 = vmatpush1.msra.mxu0 0.0
    %567 = vmatprep.subr.mxu0 0.0
    %568 = vmatpush1.msra.mxu0 0.0
    %569 = vmatprep.subr.mxu0 0.0
    %570 = vmatpush1.msra.mxu0 0.0
    %571 = vmatprep.subr.mxu0 0.0
    %572 = vmatpush1.msra.mxu0 0.0
    %573 = vmatprep.subr.mxu0 0.0
    %574 = vmatpush1.msra.mxu0 %v147
    %575 = vmatprep.subr.mxu0 0.0
    %576 = vmatpush1.msra.mxu0 %v146
    %577 = vmatprep.subr.mxu0 0.0
    %578 = vmatpush1.msra.mxu0 %v145
    %579 = vmatprep.subr.mxu0 0.0
    %580 = vmatpush1.msra.mxu0 %v144
    %581 = vmatprep.subr.mxu0 0.0
    %582 = vmatpush2.msra.mxu0 0.0
    %583 = vmatprep.subr.mxu0 0.0
    %584 = vmatpush2.msra.mxu0 0.0
    %585 = vmatprep.subr.mxu0 0.0
    %586 = vmatpush2.msra.mxu0 0.0
    %587 = vmatprep.subr.mxu0 0.0
    %588 = vmatpush2.msra.mxu0 0.0
    %589 = vmatprep.subr.mxu0 0.0
    %590 = vmatpush2.msra.mxu0 0.0
    %591 = vmatprep.subr.mxu0 0.0
    %592 = vmatpush2.msra.mxu0 0.0
    %593 = vmatprep.subr.mxu0 0.0
    %594 = vmatpush2.msra.mxu0 0.0
    %595 = vmatprep.subr.mxu0 0.0
    %596 = vmatpush2.msra.mxu0 0.0
    %597 = vmatprep.subr.mxu0 0.0
    %598 = vmatpush2.msra.mxu0 0.0
    %599 = vmatprep.subr.mxu0 0.0
    %600 = vmatpush2.msra.mxu0 0.0
    %601 = vmatprep.subr.mxu0 0.0
    %602 = vmatpush2.msra.mxu0 0.0
    %603 = vmatprep.subr.mxu0 0.0
    %604 = vmatpush2.msra.mxu0 0.0
    %605 = vmatprep.subr.mxu0 0.0
    %606 = vmatpush2.msra.mxu0 0.0
    %607 = vmatprep.subr.mxu0 0.0
    %608 = vmatpush2.msra.mxu0 0.0
    %609 = vmatprep.subr.mxu0 0.0
    %610 = vmatpush2.msra.mxu0 0.0
    %611 = vmatprep.subr.mxu0 0.0
    %612 = vmatpush2.msra.mxu0 0.0
    %613 = vmatprep.mubr.f32.mxu0 0.0
    %614 = vmatmul.mubr.f32.gmra.mxu0 %v547
    %v615 = vpop.f32.mrf.mxu0
    %v616 = vadd.f32 0.0, %v615
    %v617 = vpop.f32.mrf.mxu0
    %618 = vdwg.mxu0
    %v620 = vrot.slane %v616, 6
    %v622 = vadd.f32 %v141, %v620
    %v623 = vtanh.pop %v622
    %624 = vst.msk [vmem:[#allocation2 + $0x8] sm:$0xc] %vm305, %v623
    %v626 = vrot.slane %v623, 2
    %v627 = vsel %vm149, %v626, 0
    %629 = vmatprep.subr.mxu0 0.0
    %630 = vmatpush1.msra.mxu0 0.0
    %631 = vmatprep.subr.mxu0 0.0
    %632 = vmatpush1.msra.mxu0 0.0
    %633 = vmatprep.subr.mxu0 0.0
    %634 = vmatpush1.msra.mxu0 0.0
    %635 = vmatprep.subr.mxu0 0.0
    %636 = vmatpush1.msra.mxu0 0.0
    %637 = vmatprep.subr.mxu0 0.0
    %638 = vmatpush1.msra.mxu0 0.0
    %639 = vmatprep.subr.mxu0 0.0
    %640 = vmatpush1.msra.mxu0 0.0
    %641 = vmatprep.subr.mxu0 0.0
    %642 = vmatpush1.msra.mxu0 0.0
    %643 = vmatprep.subr.mxu0 0.0
    %644 = vmatpush1.msra.mxu0 0.0
    %645 = vmatprep.subr.mxu0 0.0
    %646 = vmatpush1.msra.mxu0 0.0
    %647 = vmatprep.subr.mxu0 0.0
    %648 = vmatpush1.msra.mxu0 0.0
    %649 = vmatprep.subr.mxu0 0.0
    %650 = vmatpush1.msra.mxu0 0.0
    %651 = vmatprep.subr.mxu0 0.0
    %652 = vmatpush1.msra.mxu0 0.0
    %653 = vmatprep.subr.mxu0 0.0
    %654 = vmatpush1.msra.mxu0 %v147
    %655 = vmatprep.subr.mxu0 0.0
    %656 = vmatpush1.msra.mxu0 %v146
    %657 = vmatprep.subr.mxu0 0.0
    %658 = vmatpush1.msra.mxu0 %v145
    %659 = vmatprep.subr.mxu0 0.0
    %660 = vmatpush1.msra.mxu0 %v144
    %661 = vmatprep.subr.mxu0 0.0
    %662 = vmatpush2.msra.mxu0 0.0
    %663 = vmatprep.subr.mxu0 0.0
    %664 = vmatpush2.msra.mxu0 0.0
    %665 = vmatprep.subr.mxu0 0.0
    %666 = vmatpush2.msra.mxu0 0.0
    %667 = vmatprep.subr.mxu0 0.0
    %668 = vmatpush2.msra.mxu0 0.0
    %669 = vmatprep.subr.mxu0 0.0
    %670 = vmatpush2.msra.mxu0 0.0
    %671 = vmatprep.subr.mxu0 0.0
    %672 = vmatpush2.msra.mxu0 0.0
    %673 = vmatprep.subr.mxu0 0.0
    %674 = vmatpush2.msra.mxu0 0.0
    %675 = vmatprep.subr.mxu0 0.0
    %676 = vmatpush2.msra.mxu0 0.0
    %677 = vmatprep.subr.mxu0 0.0
    %678 = vmatpush2.msra.mxu0 0.0
    %679 = vmatprep.subr.mxu0 0.0
    %680 = vmatpush2.msra.mxu0 0.0
    %681 = vmatprep.subr.mxu0 0.0
    %682 = vmatpush2.msra.mxu0 0.0
    %683 = vmatprep.subr.mxu0 0.0
    %684 = vmatpush2.msra.mxu0 0.0
    %685 = vmatprep.subr.mxu0 0.0
    %686 = vmatpush2.msra.mxu0 0.0
    %687 = vmatprep.subr.mxu0 0.0
    %688 = vmatpush2.msra.mxu0 0.0
    %689 = vmatprep.subr.mxu0 0.0
    %690 = vmatpush2.msra.mxu0 0.0
    %691 = vmatprep.subr.mxu0 0.0
    %692 = vmatpush2.msra.mxu0 0.0
    %693 = vmatprep.mubr.f32.mxu0 0.0
    %694 = vmatmul.mubr.f32.gmra.mxu0 %v627
    %v695 = vpop.f32.mrf.mxu0
    %v696 = vadd.f32 0.0, %v695
    %v697 = vpop.f32.mrf.mxu0
    %698 = vdwg.mxu0
    %v700 = vrot.slane %v696, 4
    %v702 = vadd.f32 %v141, %v700
    %v703 = vtanh.pop %v702
    %704 = vst.msk [vmem:[#allocation2 + $0x8] sm:$0x30] %vm386, %v703
    %v706 = vrot.slane %v703, 4
    %v707 = vsel %vm149, %v706, 0
    %709 = vmatprep.subr.mxu0 0.0
    %710 = vmatpush1.msra.mxu0 0.0
    %711 = vmatprep.subr.mxu0 0.0
    %712 = vmatpush1.msra.mxu0 0.0
    %713 = vmatprep.subr.mxu0 0.0
    %714 = vmatpush1.msra.mxu0 0.0
    %715 = vmatprep.subr.mxu0 0.0
    %716 = vmatpush1.msra.mxu0 0.0
    %717 = vmatprep.subr.mxu0 0.0
    %718 = vmatpush1.msra.mxu0 0.0
    %719 = vmatprep.subr.mxu0 0.0
    %720 = vmatpush1.msra.mxu0 0.0
    %721 = vmatprep.subr.mxu0 0.0
    %722 = vmatpush1.msra.mxu0 0.0
    %723 = vmatprep.subr.mxu0 0.0
    %724 = vmatpush1.msra.mxu0 0.0
    %725 = vmatprep.subr.mxu0 0.0
    %726 = vmatpush1.msra.mxu0 0.0
    %727 = vmatprep.subr.mxu0 0.0
    %728 = vmatpush1.msra.mxu0 0.0
    %729 = vmatprep.subr.mxu0 0.0
    %730 = vmatpush1.msra.mxu0 0.0
    %731 = vmatprep.subr.mxu0 0.0
    %732 = vmatpush1.msra.mxu0 0.0
    %733 = vmatprep.subr.mxu0 0.0
    %734 = vmatpush1.msra.mxu0 %v147
    %735 = vmatprep.subr.mxu0 0.0
    %736 = vmatpush1.msra.mxu0 %v146
    %737 = vmatprep.subr.mxu0 0.0
    %738 = vmatpush1.msra.mxu0 %v145
    %739 = vmatprep.subr.mxu0 0.0
    %740 = vmatpush1.msra.mxu0 %v144
    %741 = vmatprep.subr.mxu0 0.0
    %742 = vmatpush2.msra.mxu0 0.0
    %743 = vmatprep.subr.mxu0 0.0
    %744 = vmatpush2.msra.mxu0 0.0
    %745 = vmatprep.subr.mxu0 0.0
    %746 = vmatpush2.msra.mxu0 0.0
    %747 = vmatprep.subr.mxu0 0.0
    %748 = vmatpush2.msra.mxu0 0.0
    %749 = vmatprep.subr.mxu0 0.0
    %750 = vmatpush2.msra.mxu0 0.0
    %751 = vmatprep.subr.mxu0 0.0
    %752 = vmatpush2.msra.mxu0 0.0
    %753 = vmatprep.subr.mxu0 0.0
    %754 = vmatpush2.msra.mxu0 0.0
    %755 = vmatprep.subr.mxu0 0.0
    %756 = vmatpush2.msra.mxu0 0.0
    %757 = vmatprep.subr.mxu0 0.0
    %758 = vmatpush2.msra.mxu0 0.0
    %759 = vmatprep.subr.mxu0 0.0
    %760 = vmatpush2.msra.mxu0 0.0
    %761 = vmatprep.subr.mxu0 0.0
    %762 = vmatpush2.msra.mxu0 0.0
    %763 = vmatprep.subr.mxu0 0.0
    %764 = vmatpush2.msra.mxu0 0.0
    %765 = vmatprep.subr.mxu0 0.0
    %766 = vmatpush2.msra.mxu0 0.0
    %767 = vmatprep.subr.mxu0 0.0
    %768 = vmatpush2.msra.mxu0 0.0
    %769 = vmatprep.subr.mxu0 0.0
    %770 = vmatpush2.msra.mxu0 0.0
    %771 = vmatprep.subr.mxu0 0.0
    %772 = vmatpush2.msra.mxu0 0.0
    %773 = vmatprep.mubr.f32.mxu0 0.0
    %774 = vmatmul.mubr.f32.gmra.mxu0 %v707
    %v775 = vpop.f32.mrf.mxu0
    %v776 = vadd.f32 0.0, %v775
    %v777 = vpop.f32.mrf.mxu0
    %778 = vdwg.mxu0
    %v780 = vrot.slane %v776, 2
    %v782 = vadd.f32 %v141, %v780
    %v783 = vtanh.pop %v782
    %784 = vst.msk [vmem:[#allocation2 + $0x8] sm:$0xc0] %vm467, %v783
    %785 = vst.msk [vmem:[#allocation5 - $0x6] sm:$0xc0] %vm467, %v783
    %v786 = vld [vmem:[#allocation2] sm:$0xff]
    %v787 = vld [vmem:[#allocation2 + $0x8] sm:$0xff]
    %v788 = vld [vmem:[%s5] sm:$0xff]
    %v789 = vld [vmem:[%s5 + $0x8] sm:$0xff]
    %v790 = vld [vmem:[%s5 + $0x10] sm:$0xff]
    %v791 = vld [vmem:[%s5 + $0x18] sm:$0xff]
    %v792 = vld [vmem:[%s6] sm:$0x1]
    %v794 = vlaneseq
    %v795 = vshrl.u32 %v794, 7
    %v796 = vsub.s32 0, %v795
    %v797 = vrot.slane %v792, %v796
    %v800 = vsel %vm149, %v786, 0
    %v803 = vsel %vm149, %v787, 0
    %805 = vmatprep.subr.mxu0 0.0
    %806 = vmatpush1.msra.mxu0 0.0
    %807 = vmatprep.subr.mxu0 0.0
    %808 = vmatpush1.msra.mxu0 0.0
    %809 = vmatprep.subr.mxu0 0.0
    %810 = vmatpush1.msra.mxu0 0.0
    %811 = vmatprep.subr.mxu0 0.0
    %812 = vmatpush1.msra.mxu0 0.0
    %813 = vmatprep.subr.mxu0 0.0
    %814 = vmatpush1.msra.mxu0 0.0
    %815 = vmatprep.subr.mxu0 0.0
    %816 = vmatpush1.msra.mxu0 0.0
    %817 = vmatprep.subr.mxu0 0.0
    %818 = vmatpush1.msra.mxu0 0.0
    %819 = vmatprep.subr.mxu0 0.0
    %820 = vmatpush1.msra.mxu0 0.0
    %821 = vmatprep.subr.mxu0 0.0
    %822 = vmatpush1.msra.mxu0 0.0
    %823 = vmatprep.subr.mxu0 0.0
    %824 = vmatpush1.msra.mxu0 0.0
    %825 = vmatprep.subr.mxu0 0.0
    %826 = vmatpush1.msra.mxu0 0.0
    %827 = vmatprep.subr.mxu0 0.0
    %828 = vmatpush1.msra.mxu0 0.0
    %829 = vmatprep.subr.mxu0 0.0
    %830 = vmatpush1.msra.mxu0 %v791
    %831 = vmatprep.subr.mxu0 0.0
    %832 = vmatpush1.msra.mxu0 %v790
    %833 = vmatprep.subr.mxu0 0.0
    %834 = vmatpush1.msra.mxu0 %v789
    %835 = vmatprep.subr.mxu0 0.0
    %836 = vmatpush1.msra.mxu0 %v788
    %837 = vmatprep.subr.mxu0 0.0
    %838 = vmatpush2.msra.mxu0 0.0
    %839 = vmatprep.subr.mxu0 0.0
    %840 = vmatpush2.msra.mxu0 0.0
    %841 = vmatprep.subr.mxu0 0.0
    %842 = vmatpush2.msra.mxu0 0.0
    %843 = vmatprep.subr.mxu0 0.0
    %844 = vmatpush2.msra.mxu0 0.0
    %845 = vmatprep.subr.mxu0 0.0
    %846 = vmatpush2.msra.mxu0 0.0
    %847 = vmatprep.subr.mxu0 0.0
    %848 = vmatpush2.msra.mxu0 0.0
    %849 = vmatprep.subr.mxu0 0.0
    %850 = vmatpush2.msra.mxu0 0.0
    %851 = vmatprep.subr.mxu0 0.0
    %852 = vmatpush2.msra.mxu0 0.0
    %853 = vmatprep.subr.mxu0 0.0
    %854 = vmatpush2.msra.mxu0 0.0
    %855 = vmatprep.subr.mxu0 0.0
    %856 = vmatpush2.msra.mxu0 0.0
    %857 = vmatprep.subr.mxu0 0.0
    %858 = vmatpush2.msra.mxu0 0.0
    %859 = vmatprep.subr.mxu0 0.0
    %860 = vmatpush2.msra.mxu0 0.0
    %861 = vmatprep.subr.mxu0 0.0
    %862 = vmatpush2.msra.mxu0 0.0
    %863 = vmatprep.subr.mxu0 0.0
    %864 = vmatpush2.msra.mxu0 0.0
    %865 = vmatprep.subr.mxu0 0.0
    %866 = vmatpush2.msra.mxu0 0.0
    %867 = vmatprep.subr.mxu0 0.0
    %868 = vmatpush2.msra.mxu0 0.0
    %869 = vmatprep.mubr.f32.mxu0 0.0
    %870 = vmatmul.mubr.f32.gmra.mxu0 %v800
    %v871 = vpop.f32.mrf.mxu0
    %v872 = vadd.f32 %v797, %v871
    %v873 = vpop.f32.mrf.mxu0
    %874 = vmatprep.mubr.f32.mxu0 0.0
    %875 = vmatmul.mubr.f32.gmra.mxu0 %v803
    %v876 = vpop.f32.mrf.mxu0
    %v877 = vadd.f32 %v797, %v876
    %v878 = vpop.f32.mrf.mxu0
    %879 = vdwg.mxu0
    %880 = vst [vmem:[#allocation3] sm:$0xff] %v872
    %881 = vst [vmem:[#allocation3 + $0x8] sm:$0xff] %v877
    // Predicated region
    $region30: #{rnn_model.1} parent=1 // pred_check
      _
    $region31: #{rnn_model.1} parent=1 // pred_check_branch
      %883 = sbr.rel (0) target = $region33
    $region32: #{rnn_model.1} parent=1 // pred_region
      %s885 = ssub.s32 256, 256
      %886 = vsyncadd [#allocation4], %s885
      %s887 = sshll.u32 [#allocation3], 4
      %s888 = int_to_ptr.vmem [resolvable:$true] %s887
      %893 = dma.vmem_to_hbm [thread:$0]  %s888, 256, %s7, [#allocation4], 128, 128, 8
    $region33: #{rnn_model.1} parent=1 // pred_fallthru
      _
    // Predicated region
    $region34: #{rnn_model.1} parent=1 // pred_check
      _
    $region35: #{rnn_model.1} parent=1 // pred_check_branch
      %895 = sbr.rel (0) target = $region37
    $region36: #{rnn_model.1} parent=1 // pred_region
      %s897 = ssub.s32 32, 32
      %898 = vsyncadd [#allocation6], %s897
      %s900 = sshll.u32 [#allocation5], 4
      %s901 = int_to_ptr.vmem [resolvable:$true] %s900
      %903 = dma.vmem_to_hbm [thread:$0]  %s901, 32, %s8, [#allocation6]
    $region37: #{rnn_model.1} parent=1 // pred_fallthru
      _
    // Predicated region
    $region38: #{rnn_model.1} parent=1 // pred_check
      _
    $region39: #{rnn_model.1} parent=1 // pred_check_branch
      %905 = sbr.rel (0) target = $region41
    $region40: #{rnn_model.1} parent=1 // pred_region
      %906 = dma.done [#allocation4], 256
    $region41: #{rnn_model.1} parent=1 // pred_fallthru
      _
    // Predicated region
    $region42: #{rnn_model.1} parent=1 // pred_check
      _
    $region43: #{rnn_model.1} parent=1 // pred_check_branch
      %908 = sbr.rel (0) target = $region45
    $region44: #{rnn_model.1} parent=1 // pred_region
      %909 = dma.done [#allocation6], 32
    $region45: #{rnn_model.1} parent=1 // pred_fallthru
      _
    %910 = vsyncpa [#allocation4], 1
    %911 = vsyncpa [#allocation6], 1

</llo_original>
